<compile_context>
chip_gen: v5e
topology: v5e:2x2
jax: 0.10.0
libtpu: 0.0.40
codegen_flags: <defaults>
</compile_context>

<pallas_src>
import jax
import jax.numpy as jnp
from jax.experimental import pallas as pl
from jax.experimental.pallas import tpu as pltpu


def _bayes_linear_kernel(x_ref, mu_t_ref, rho_t_ref, eps_t_ref, o_ref, w_ref):
    # Rebuild the sampled weight only when the inner (M) axis restarts, i.e.
    # once per N-tile. The (K, tn) scratch is then reused for every M tile.
    @pl.when(pl.program_id(1) == 0)
    def _():
        rho = rho_t_ref[...]
        # Numerically robust softplus matching torch.F.softplus (threshold=20):
        # identity for large rho, log1p(exp(rho)) otherwise.
        std = jnp.where(rho > 20.0, rho, jnp.log1p(jnp.exp(jnp.minimum(rho, 20.0))))
        w_ref[...] = mu_t_ref[...] + std * eps_t_ref[...]

    # (tm, K) @ (K, tn) -> (tm, tn) on the MXU; no in-kernel transpose needed.
    o_ref[...] = jnp.dot(
        x_ref[...], w_ref[...], preferred_element_type=jnp.float32
    ).astype(o_ref.dtype)


def _round_up(x, m):
    return ((x + m - 1) // m) * m


def bayesian_linear_forward(x, mu, rho, eps, *, tm=None, tn=None,
                            vmem_budget_bytes=40 * 1024 * 1024):
    """x: (M, K), mu/rho/eps: (N, K) -> (M, N). All float32."""
    M, K = x.shape
    N, K2 = mu.shape
    assert K == K2 and rho.shape == mu.shape and eps.shape == mu.shape
    dtype = x.dtype

    # --- Tile selection: big MXU-friendly (8,128)-aligned tiles by default. ---
    if tm is None:
        tm = min(_round_up(M, 8), 256)
    if tn is None:
        tn = min(_round_up(N, 128), 512)

    def footprint(tm_, tn_):
        # double-buffered inputs + double-buffered output + weight scratch (f32)
        return 4 * (2 * tm_ * K + 3 * 2 * K * tn_ + 2 * tm_ * tn_ + K * tn_)

    # Shrink tiles if the full-K resident footprint would blow the VMEM budget
    # (v7x has only 64 MiB physical VMEM / 32 MiB default scoped).
    while footprint(tm, tn) > vmem_budget_bytes and (tn > 128 or tm > 8):
        if tn > 128:
            tn = max(128, tn // 2)
        else:
            tm = max(8, tm // 2)
    # TODO(synk): for very large K the better fix is a third innermost
    # "arbitrary" K grid axis with an f32 VMEM accumulator instead of shrinking.

    Mp = _round_up(M, tm)
    Np = _round_up(N, tn)

    x_p = jnp.pad(x, ((0, Mp - M), (0, 0))) if Mp != M else x

    def prep(p):
        if Np != N:
            p = jnp.pad(p, ((0, Np - N), (0, 0)))
        # Pre-transpose to (K, N): RHS tiles are (K, tn) with N on lanes.
        return p.T

    mu_t, rho_t, eps_t = prep(mu), prep(rho), prep(eps)

    grid = (Np // tn, Mp // tm)  # N outer (params resident), M inner (fast)

    cost = pl.CostEstimate(
        flops=2 * Mp * Np * K,
        transcendentals=2 * Np * K,                       # exp + log1p, once per weight
        bytes_accessed=4 * (Mp * K * (Np // tn) + 3 * Np * K + Mp * Np),
    )

    out = pl.pallas_call(
        _bayes_linear_kernel,
        out_shape=jax.ShapeDtypeStruct((Mp, Np), dtype),
        grid_spec=pltpu.PrefetchScalarGridSpec(
            num_scalar_prefetch=0,
            grid=grid,
            in_specs=[
                pl.BlockSpec((tm, K), lambda j, i: (i, 0)),   # x tile (changes with i)
                pl.BlockSpec((K, tn), lambda j, i: (0, j)),   # mu^T  tile (resident over i)
                pl.BlockSpec((K, tn), lambda j, i: (0, j)),   # rho^T tile (resident over i)
                pl.BlockSpec((K, tn), lambda j, i: (0, j)),   # eps^T tile (resident over i)
            ],
            out_specs=pl.BlockSpec((tm, tn), lambda j, i: (i, j)),
            scratch_shapes=[pltpu.VMEM((K, tn), jnp.float32)],  # sampled weight (K, tn)
        ),
        compiler_params=pltpu.CompilerParams(
            dimension_semantics=("parallel", "arbitrary"),
            vmem_limit_bytes=int(
                min(max(2 * footprint(tm, tn), 32 * 1024 * 1024), 64 * 1024 * 1024)
            ),
        ),
        cost_estimate=cost,
    )(x_p, mu_t, rho_t, eps_t)

    return out[:M, :N]


if __name__ == "__main__":
    key = jax.random.PRNGKey(0)
    k_x, k_mu, k_rho, k_eps = jax.random.split(key, 4)

    batch = 10            # deliberately NOT a multiple of 8 -> exercises padding
    in_features = 128
    out_features = 256

    # Deterministic parameter init mirroring the module's __init__:
    #   mu  = randn(out, in) * 0.1
    #   rho = randn(out, in) * -3.0
    mu = jax.random.normal(k_mu, (out_features, in_features), jnp.float32) * 0.1
    rho = jax.random.normal(k_rho, (out_features, in_features), jnp.float32) * -3.0

    # Input and the reparameterization noise eps ~ N(0, 1).
    x = jax.random.normal(k_x, (batch, in_features), jnp.float32)
    eps = jax.random.normal(k_eps, (out_features, in_features), jnp.float32)

    # Small explicit tiles so this tiny example exercises a 2x2 grid and the
    # once-per-N-tile weight hoist; defaults pick larger tiles for real shapes.
    y = bayesian_linear_forward(x, mu, rho, eps, tm=8, tn=128)
    y = jax.block_until_ready(y)

    # Reference check in plain JAX (same math as the PyTorch forward).
    std_ref = jnp.log1p(jnp.exp(rho))
    w_ref = mu + std_ref * eps
    y_ref = x @ w_ref.T
    assert y.shape == (batch, out_features)
    assert jnp.allclose(y, y_ref, atol=1e-4, rtol=1e-4)

    print("KERNEL_OK")
</pallas_src>

<mosaic_0001>
module attributes {stable_mosaic.version = 11 : i64} {
  func.func @_bayes_linear_kernel(%arg0: i32, %arg1: i32, %arg2: memref<8x128xf32, #tpu.memory_space<vmem>>, %arg3: memref<128x128xf32, #tpu.memory_space<vmem>>, %arg4: memref<128x128xf32, #tpu.memory_space<vmem>>, %arg5: memref<128x128xf32, #tpu.memory_space<vmem>>, %arg6: memref<8x128xf32, #tpu.memory_space<vmem>>, %arg7: memref<128x128xf32, #tpu.memory_space<vmem>>) attributes {dimension_semantics = [#tpu.dimension_semantics<parallel>, #tpu.dimension_semantics<arbitrary>], iteration_bounds = array<i64: 2, 2>, scalar_prefetch = 0 : i64, scratch_operands = 1 : i64, tpu.core_type = #tpu.core_type<tc>, window_params = [{transform_indices = @transform_0, window_bounds = array<i64: 8, 128>}, {transform_indices = @transform_1, window_bounds = array<i64: 128, 128>}, {transform_indices = @transform_2, window_bounds = array<i64: 128, 128>}, {transform_indices = @transform_3, window_bounds = array<i64: 128, 128>}, {transform_indices = @transform_4, window_bounds = array<i64: 8, 128>}]} {
    %c0_i32 = arith.constant 0 : i32
    %0 = arith.cmpi eq, %arg1, %c0_i32 : i32
    %1 = arith.extui %0 : i1 to i32
    %c0_i32_0 = arith.constant 0 : i32
    %2 = arith.cmpi ne, %1, %c0_i32_0 : i32
    scf.if %2 {
      %c0_6 = arith.constant 0 : index
      %c0_7 = arith.constant 0 : index
      %7 = vector.load %arg4[%c0_6, %c0_7] : memref<128x128xf32, #tpu.memory_space<vmem>>, vector<128x128xf32>
      %cst_8 = arith.constant 2.000000e+01 : f32
      %8 = vector.broadcast %cst_8 : f32 to vector<128x128xf32>
      %9 = arith.cmpf ogt, %7, %8 : vector<128x128xf32>
      %cst_9 = arith.constant 2.000000e+01 : f32
      %10 = vector.broadcast %cst_9 : f32 to vector<128x128xf32>
      %11 = arith.minimumf %7, %10 : vector<128x128xf32>
      %12 = math.exp %11 : vector<128x128xf32>
      %13 = math.log1p %12 : vector<128x128xf32>
      %14 = arith.select %9, %7, %13 : vector<128x128xi1>, vector<128x128xf32>
      %c0_10 = arith.constant 0 : index
      %c0_11 = arith.constant 0 : index
      %15 = vector.load %arg3[%c0_10, %c0_11] : memref<128x128xf32, #tpu.memory_space<vmem>>, vector<128x128xf32>
      %c0_12 = arith.constant 0 : index
      %c0_13 = arith.constant 0 : index
      %16 = vector.load %arg5[%c0_12, %c0_13] : memref<128x128xf32, #tpu.memory_space<vmem>>, vector<128x128xf32>
      %17 = arith.mulf %14, %16 : vector<128x128xf32>
      %18 = arith.addf %15, %17 : vector<128x128xf32>
      %c0_14 = arith.constant 0 : index
      %c0_15 = arith.constant 0 : index
      %19 = vector.load %arg7[%c0_14, %c0_15] : memref<128x128xf32, #tpu.memory_space<vmem>>, vector<128x128xf32>
      tpu.vector_store %arg7[%c0_14, %c0_15], %18 {strides = array<i32>} : memref<128x128xf32, #tpu.memory_space<vmem>>, vector<128x128xf32>,
    } else {
    }
    %c0 = arith.constant 0 : index
    %c0_1 = arith.constant 0 : index
    %3 = vector.load %arg2[%c0, %c0_1] : memref<8x128xf32, #tpu.memory_space<vmem>>, vector<8x128xf32>
    %c0_2 = arith.constant 0 : index
    %c0_3 = arith.constant 0 : index
    %4 = vector.load %arg7[%c0_2, %c0_3] : memref<128x128xf32, #tpu.memory_space<vmem>>, vector<128x128xf32>
    %cst = arith.constant dense<0.000000e+00> : vector<8x128xf32>
    %5 = tpu.matmul %3, %4, %cst {dimension_numbers = #tpu.dot_dimension_numbers<[1], [0], [0], [1], [0, 0, 1, 1], [], []>} : vector<8x128xf32>, vector<128x128xf32>, vector<8x128xf32> -> vector<8x128xf32>
    %c0_4 = arith.constant 0 : index
    %c0_5 = arith.constant 0 : index
    %6 = vector.load %arg6[%c0_4, %c0_5] : memref<8x128xf32, #tpu.memory_space<vmem>>, vector<8x128xf32>
    tpu.vector_store %arg6[%c0_4, %c0_5], %5 {strides = array<i32>} : memref<8x128xf32, #tpu.memory_space<vmem>>, vector<8x128xf32>,
    return
  }
  func.func @transform_0(%arg0: i32, %arg1: i32) -> (i32, i32) {
    %c0_i32 = arith.constant 0 : i32
    %c0_i32_0 = arith.constant 0 : i32
    return %arg1, %c0_i32 : i32, i32
  }
  func.func @transform_1(%arg0: i32, %arg1: i32) -> (i32, i32) {
    %c0_i32 = arith.constant 0 : i32
    %c0_i32_0 = arith.constant 0 : i32
    return %c0_i32, %arg0 : i32, i32
  }
  func.func @transform_2(%arg0: i32, %arg1: i32) -> (i32, i32) {
    %c0_i32 = arith.constant 0 : i32
    %c0_i32_0 = arith.constant 0 : i32
    return %c0_i32, %arg0 : i32, i32
  }
  func.func @transform_3(%arg0: i32, %arg1: i32) -> (i32, i32) {
    %c0_i32 = arith.constant 0 : i32
    %c0_i32_0 = arith.constant 0 : i32
    return %c0_i32, %arg0 : i32, i32
  }
  func.func @transform_4(%arg0: i32, %arg1: i32) -> (i32, i32) {
    %c0_i32 = arith.constant 0 : i32
    return %arg1, %arg0 : i32, i32
  }
}

</mosaic_0001>

<llo_original>
// kernel: tpu_custom_call.1
$region0: #{tpu_custom_call.1}
  #allocation0 [shape = 'u32[]', space=smem, size = 0x4, offset = 0x4, fixed_abs, tag = 'smem constant byte address 0x4 - core index']
  #allocation1 [shape = 'u32[72,128]{1,0:T(1,128)}', space=vmem, size = 0x9000, scoped, tag = 'internal scratch']
  #allocation2 [shape = 'f32[128,128]{1,0:T(8,128)}', space=vmem, size = 0x10000, scoped, tag = 'scratch operand']
  %s0 = inlined_call_operand.hbm [shape: f32[16,128], index: 0, kind: input, shape index: {}]
  %s1 = inlined_call_operand.hbm [shape: f32[128,256], index: 1, kind: input, shape index: {}]
  %s2 = inlined_call_operand.hbm [shape: f32[128,256], index: 2, kind: input, shape index: {}]
  %s3 = inlined_call_operand.hbm [shape: f32[128,256], index: 3, kind: input, shape index: {}]
  %s4 = inlined_call_operand.hbm [shape: f32[16,256], index: 4, kind: output, shape index: {}]
  %s5 = sld [smem:[#allocation0]]
  $region69: #{tpu_custom_call.1} parent=0
    _
  %s7 = ssub.s32 1, %s5
  %s8 = scalar_select 0, %s7, %s5
  $region1: #{tpu_custom_call.1} parent=0
    #allocation3 [shape = 'u8[8192]{0}', space=vmem, size = 0x2000, scoped, tag = 'input window, operand 0']
    #allocation4 [shape = 's32[2]{0}', space=sflag, size = 0x8, scoped, tag = 'scoped memory for tpu_custom_call.1']
    #allocation5 [shape = 's32[2]{0}', space=sflag, size = 0x8, scoped, tag = 'scoped memory for tpu_custom_call.1']
    #allocation6 [shape = 'u8[131072]{0}', space=vmem, size = 0x20000, scoped, tag = 'input window, operand 1']
    #allocation7 [shape = 's32[2]{0}', space=sflag, size = 0x8, scoped, tag = 'scoped memory for tpu_custom_call.1']
    #allocation8 [shape = 'u8[131072]{0}', space=vmem, size = 0x20000, scoped, tag = 'input window, operand 2']
    #allocation9 [shape = 'u8[131072]{0}', space=vmem, size = 0x20000, scoped, tag = 'input window, operand 3']
    #allocation10 [shape = 's32[2]{0}', space=sflag, size = 0x8, scoped, tag = 'scoped memory for tpu_custom_call.1']
    #allocation11 [shape = 'u8[8192]{0}', space=vmem, size = 0x2000, scoped, tag = 'output window, operand 0']
    %9 = vsyncpa [#allocation4], 0
    %s10 = scalar_lea.sflag [#allocation4], 1
    %11 = vsyncpa %s10, 0
    %12 = vsyncpa [#allocation7], 0
    %s13 = scalar_lea.sflag [#allocation7], 1
    %14 = vsyncpa %s13, 0
    %15 = vsyncpa [#allocation10], 0
    %s16 = scalar_lea.sflag [#allocation10], 1
    %17 = vsyncpa %s16, 0
    %18 = vsyncpa [#allocation5], 0
    %s19 = scalar_lea.sflag [#allocation5], 1
    %20 = vsyncpa %s19, 0
    loop: start=0, step=1, limit=6
    $region2: #{tpu_custom_call.1} parent=1 // loop_pre_header
      _
    $region3: #{tpu_custom_call.1} parent=1 // loop_header
      %s22 = sphi 0, %s26
      %p23 = scmp.ge.s32.totalorder %s22, 6
      %s29 = sphi 0, %s41
      %s30 = sphi 0, %s37
      %s31 = sphi 0, %s29
      %s32 = sphi 0, %s30
      %s33 = sphi 0, %s31
      %s34 = sphi 0, %s32
      %s44 = sphi 0, %s46
      %s47 = sphi 0, %s44
      %s48 = sphi 0, %s47
      %s64 = sphi 0, %s48
      %s70 = sphi 0, %s72
      %s73 = sphi 0, %s70
      %s74 = sphi 0, %s73
      %s90 = sphi 0, %s74
      %s96 = sphi 0, %s98
      %s99 = sphi 0, %s96
      %s100 = sphi 0, %s99
      %s116 = sphi 0, %s100
      %s122 = sphi 0, %s124
      %s125 = sphi 0, %s122
      %s126 = sphi 0, %s125
      %s142 = sphi 0, %s126
      %s150 = sphi 0, %s152
      %s153 = sphi 0, %s150
      %s154 = sphi 0, %s153
      %s170 = sphi 0, %s154
    $region4: #{tpu_custom_call.1} parent=1 // loop_header_branch
      %25 = sbr.rel (%p23) target = $region8
    $region5: #{tpu_custom_call.1} parent=1 // loop_body
      %s27 = ssub.s32 %s22, 1
      %s28 = ssub.s32 %s22, 2
      %s35 = sadd.s32 1, %s30
      %p36 = scmp.ge.s32.totalorder %s35, 2
      %s37 = scalar_select %p36, 0, %s35
      %s38 = sadd.s32 1, %s29
      %s39 = scalar_select %p36, %s38, %s29
      %p40 = scmp.ge.s32.totalorder %s39, 2
      %s41 = scalar_select %p40, 0, %s39
      %s42 = ssub.s32 %s30, %s37
      %p43 = scmp.eq.s32.totalorder %s42, 0
      %s45 = sadd.s32 %s44, 1
      %s46 = scalar_select %p43, %s44, %s45
      %p49 = pneg %p43
      %p50 = scmp.eq.s32.totalorder %s22, 3
      %p51 = por %p49, %p50
      %p52 = scmp.ne.s32.totalorder %s44, %s47
      %p53 = scmp.eq.s32.totalorder %s22, 0
      %p54 = por %p52, %p53
      %p55 = scmp.ne.s32.totalorder %s44, %s47
      %p56 = scmp.eq.s32.totalorder %s27, 3
      %p57 = por %p55, %p56
      %p58 = scmp.ne.s32.totalorder %s47, %s48
      %p59 = scmp.eq.s32.totalorder %s27, 0
      %p60 = por %p58, %p59
      %p61 = scmp.ne.s32.totalorder %s47, %s48
      %p62 = scmp.eq.s32.totalorder %s28, 3
      %p63 = por %p61, %p62
      %p65 = scmp.ne.s32.totalorder %s48, %s64
      %p66 = scmp.eq.s32.totalorder %s28, 0
      %p67 = por %p65, %p66
      %s68 = ssub.s32 %s29, %s41
      %p69 = scmp.eq.s32.totalorder %s68, 0
      %s71 = sadd.s32 %s70, 1
      %s72 = scalar_select %p69, %s70, %s71
      %p75 = pneg %p69
      %p76 = scmp.eq.s32.totalorder %s22, 3
      %p77 = por %p75, %p76
      %p78 = scmp.ne.s32.totalorder %s70, %s73
      %p79 = scmp.eq.s32.totalorder %s22, 0
      %p80 = por %p78, %p79
      %p81 = scmp.ne.s32.totalorder %s70, %s73
      %p82 = scmp.eq.s32.totalorder %s27, 3
      %p83 = por %p81, %p82
      %p84 = scmp.ne.s32.totalorder %s73, %s74
      %p85 = scmp.eq.s32.totalorder %s27, 0
      %p86 = por %p84, %p85
      %p87 = scmp.ne.s32.totalorder %s73, %s74
      %p88 = scmp.eq.s32.totalorder %s28, 3
      %p89 = por %p87, %p88
      %p91 = scmp.ne.s32.totalorder %s74, %s90
      %p92 = scmp.eq.s32.totalorder %s28, 0
      %p93 = por %p91, %p92
      %s94 = ssub.s32 %s29, %s41
      %p95 = scmp.eq.s32.totalorder %s94, 0
      %s97 = sadd.s32 %s96, 1
      %s98 = scalar_select %p95, %s96, %s97
      %p101 = pneg %p95
      %p102 = scmp.eq.s32.totalorder %s22, 3
      %p103 = por %p101, %p102
      %p104 = scmp.ne.s32.totalorder %s96, %s99
      %p105 = scmp.eq.s32.totalorder %s22, 0
      %p106 = por %p104, %p105
      %p107 = scmp.ne.s32.totalorder %s96, %s99
      %p108 = scmp.eq.s32.totalorder %s27, 3
      %p109 = por %p107, %p108
      %p110 = scmp.ne.s32.totalorder %s99, %s100
      %p111 = scmp.eq.s32.totalorder %s27, 0
      %p112 = por %p110, %p111
      %p113 = scmp.ne.s32.totalorder %s99, %s100
      %p114 = scmp.eq.s32.totalorder %s28, 3
      %p115 = por %p113, %p114
      %p117 = scmp.ne.s32.totalorder %s100, %s116
      %p118 = scmp.eq.s32.totalorder %s28, 0
      %p119 = por %p117, %p118
      %s120 = ssub.s32 %s29, %s41
      %p121 = scmp.eq.s32.totalorder %s120, 0
      %s123 = sadd.s32 %s122, 1
      %s124 = scalar_select %p121, %s122, %s123
      %p127 = pneg %p121
      %p128 = scmp.eq.s32.totalorder %s22, 3
      %p129 = por %p127, %p128
      %p130 = scmp.ne.s32.totalorder %s122, %s125
      %p131 = scmp.eq.s32.totalorder %s22, 0
      %p132 = por %p130, %p131
      %p133 = scmp.ne.s32.totalorder %s122, %s125
      %p134 = scmp.eq.s32.totalorder %s27, 3
      %p135 = por %p133, %p134
      %p136 = scmp.ne.s32.totalorder %s125, %s126
      %p137 = scmp.eq.s32.totalorder %s27, 0
      %p138 = por %p136, %p137
      %p139 = scmp.ne.s32.totalorder %s125, %s126
      %p140 = scmp.eq.s32.totalorder %s28, 3
      %p141 = por %p139, %p140
      %p143 = scmp.ne.s32.totalorder %s126, %s142
      %p144 = scmp.eq.s32.totalorder %s28, 0
      %p145 = por %p143, %p144
      %s146 = ssub.s32 %s30, %s37
      %s147 = ssub.s32 %s29, %s41
      %s148 = sor.u32 %s146, %s147
      %p149 = scmp.eq.s32.totalorder %s148, 0
      %s151 = sadd.s32 %s150, 1
      %s152 = scalar_select %p149, %s150, %s151
      %p155 = pneg %p149
      %p156 = scmp.eq.s32.totalorder %s22, 3
      %p157 = por %p155, %p156
      %p158 = scmp.ne.s32.totalorder %s150, %s153
      %p159 = scmp.eq.s32.totalorder %s22, 0
      %p160 = por %p158, %p159
      %p161 = scmp.ne.s32.totalorder %s150, %s153
      %p162 = scmp.eq.s32.totalorder %s27, 3
      %p163 = por %p161, %p162
      %p164 = scmp.ne.s32.totalorder %s153, %s154
      %p165 = scmp.eq.s32.totalorder %s27, 0
      %p166 = por %p164, %p165
      %p167 = scmp.ne.s32.totalorder %s153, %s154
      %p168 = scmp.eq.s32.totalorder %s28, 3
      %p169 = por %p167, %p168
      %p171 = scmp.ne.s32.totalorder %s154, %s170
      %p172 = scmp.eq.s32.totalorder %s28, 0
      %p173 = por %p171, %p172
      %p174 = scmp.le.s32.totalorder 1, %s22
      %p175 = scmp.lt.s32.totalorder %s22, 5
      %p176 = pnand %p174, %p175
      %p177 = pneg %p176
      // Predicated region
      $region9: #{tpu_custom_call.1} parent=5 // pred_check
        _
      $region10: #{tpu_custom_call.1} parent=5 // pred_check_branch
        %179 = sbr.rel (%p176) target = $region12
      $region11: #{tpu_custom_call.1} parent=5 // pred_region
        %s180 = ssub.s32 %s22, 1
      $region12: #{tpu_custom_call.1} parent=5 // pred_fallthru
        _
      %p181 = scmp.lt.s32.totalorder %s22, 4
      // Predicated region
      $region13: #{tpu_custom_call.1} parent=5 // pred_check
        %p182 = pneg %p181
      $region14: #{tpu_custom_call.1} parent=5 // pred_check_branch
        %184 = sbr.rel (%p182) target = $region16
      $region15: #{tpu_custom_call.1} parent=5 // pred_region
        // Predicated region
        $region17: #{tpu_custom_call.1} parent=15 // pred_check
          %p185 = pneg %p54
        $region18: #{tpu_custom_call.1} parent=15 // pred_check_branch
          %187 = sbr.rel (%p185) target = $region20
        $region19: #{tpu_custom_call.1} parent=15 // pred_region
          %s188 = sand.u32 %s44, 1
          %s189 = scalar_lea.sflag [#allocation4], %s188
          %s190 = sand.u32 %s44, 1
          %s191 = smul.addr %s190, 8
          %s192 = scalar_lea.vmem [#allocation3], %s191
          %194 = vsyncadd %s189, 0
          %s195 = smul.addr %s30, 8
          %s196 = scalar_lea.hbm %s0, %s195
          %s198 = sshll.u32 %s196, 4
          %s199 = int_to_ptr.hbm [resolvable:$true] %s198
          %s200 = sshll.u32 %s192, 4
          %s201 = int_to_ptr.vmem [resolvable:$true] %s200
          %203 = dma.hbm_to_vmem [thread:$0]  %s199, 128, %s201, %s189
        $region20: #{tpu_custom_call.1} parent=15 // pred_fallthru
          _
        // Predicated region
        $region21: #{tpu_custom_call.1} parent=15 // pred_check
          %p204 = pneg %p80
        $region22: #{tpu_custom_call.1} parent=15 // pred_check_branch
          %206 = sbr.rel (%p204) target = $region24
        $region23: #{tpu_custom_call.1} parent=15 // pred_region
          %s207 = sand.u32 %s22, 1
          %s208 = scalar_lea.sflag [#allocation7], %s207
          %s209 = sand.u32 %s70, 1
          %s210 = smul.addr %s209, 128
          %s211 = scalar_lea.vmem [#allocation6], %s210
          %213 = vsyncadd %s208, 0
          %s214 = smul.addr %s29, 8
          %s215 = scalar_lea.hbm %s1, %s214
          %s216 = sshll.u32 %s215, 4
          %s217 = int_to_ptr.hbm [resolvable:$true] %s216
          %s218 = sshll.u32 %s211, 4
          %s219 = int_to_ptr.vmem [resolvable:$true] %s218
          %224 = dma.hbm_to_vmem [thread:$0]  %s217, 2048, %s219, %s208, 256, 128, 8
        $region24: #{tpu_custom_call.1} parent=15 // pred_fallthru
          _
        // Predicated region
        $region25: #{tpu_custom_call.1} parent=15 // pred_check
          %p225 = pneg %p106
        $region26: #{tpu_custom_call.1} parent=15 // pred_check_branch
          %227 = sbr.rel (%p225) target = $region28
        $region27: #{tpu_custom_call.1} parent=15 // pred_region
          %s228 = sand.u32 %s22, 1
          %s229 = scalar_lea.sflag [#allocation7], %s228
          %s230 = sand.u32 %s96, 1
          %s231 = smul.addr %s230, 128
          %s232 = scalar_lea.vmem [#allocation8], %s231
          %234 = vsyncadd %s229, 0
          %s235 = smul.addr %s29, 8
          %s236 = scalar_lea.hbm %s2, %s235
          %s237 = sshll.u32 %s236, 4
          %s238 = int_to_ptr.hbm [resolvable:$true] %s237
          %s239 = sshll.u32 %s232, 4
          %s240 = int_to_ptr.vmem [resolvable:$true] %s239
          %245 = dma.hbm_to_vmem [thread:$0]  %s238, 2048, %s240, %s229, 256, 128, 8
        $region28: #{tpu_custom_call.1} parent=15 // pred_fallthru
          _
        // Predicated region
        $region29: #{tpu_custom_call.1} parent=15 // pred_check
          %p246 = pneg %p132
        $region30: #{tpu_custom_call.1} parent=15 // pred_check_branch
          %248 = sbr.rel (%p246) target = $region32
        $region31: #{tpu_custom_call.1} parent=15 // pred_region
          %s249 = sand.u32 %s122, 1
          %s250 = scalar_lea.sflag [#allocation10], %s249
          %s251 = sand.u32 %s122, 1
          %s252 = smul.addr %s251, 128
          %s253 = scalar_lea.vmem [#allocation9], %s252
          %255 = vsyncadd %s250, 0
          %s256 = smul.addr %s29, 8
          %s257 = scalar_lea.hbm %s3, %s256
          %s258 = sshll.u32 %s257, 4
          %s259 = int_to_ptr.hbm [resolvable:$true] %s258
          %s260 = sshll.u32 %s253, 4
          %s261 = int_to_ptr.vmem [resolvable:$true] %s260
          %266 = dma.hbm_to_vmem [thread:$0]  %s259, 2048, %s261, %s250, 256, 128, 8
        $region32: #{tpu_custom_call.1} parent=15 // pred_fallthru
          _
      $region16: #{tpu_custom_call.1} parent=5 // pred_fallthru
        _
      %p267 = scmp.le.s32.totalorder 1, %s22
      %p268 = scmp.lt.s32.totalorder %s22, 5
      %p269 = pnand %p267, %p268
      %p270 = pneg %p269
      // Predicated region
      $region33: #{tpu_custom_call.1} parent=5 // pred_check
        _
      $region34: #{tpu_custom_call.1} parent=5 // pred_check_branch
        %272 = sbr.rel (%p269) target = $region36
      $region35: #{tpu_custom_call.1} parent=5 // pred_region
        %s273 = ssub.s32 %s22, 1
        %s274 = sand.u32 %s47, 1
        %s275 = scalar_lea.sflag [#allocation4], %s274
        %s276 = sand.u32 %s47, 1
        %s277 = smul.addr %s276, 8
        %s278 = scalar_lea.vmem [#allocation3], %s277
        // Predicated region
        $region37: #{tpu_custom_call.1} parent=35 // pred_check
          %p279 = pneg %p60
        $region38: #{tpu_custom_call.1} parent=35 // pred_check_branch
          %281 = sbr.rel (%p279) target = $region40
        $region39: #{tpu_custom_call.1} parent=35 // pred_region
          %283 = dma.done %s275, 128
        $region40: #{tpu_custom_call.1} parent=35 // pred_fallthru
          _
        %s284 = sand.u32 %s27, 1
        %s285 = scalar_lea.sflag [#allocation7], %s284
        %s286 = sand.u32 %s73, 1
        %s287 = smul.addr %s286, 128
        %s288 = scalar_lea.vmem [#allocation6], %s287
        // Predicated region
        $region41: #{tpu_custom_call.1} parent=35 // pred_check
          %p289 = pneg %p86
        $region42: #{tpu_custom_call.1} parent=35 // pred_check_branch
          %291 = sbr.rel (%p289) target = $region44
        $region43: #{tpu_custom_call.1} parent=35 // pred_region
          %293 = dma.done %s285, 2048
        $region44: #{tpu_custom_call.1} parent=35 // pred_fallthru
          _
        %s294 = sand.u32 %s27, 1
        %s295 = scalar_lea.sflag [#allocation7], %s294
        %s296 = sand.u32 %s99, 1
        %s297 = smul.addr %s296, 128
        %s298 = scalar_lea.vmem [#allocation8], %s297
        // Predicated region
        $region45: #{tpu_custom_call.1} parent=35 // pred_check
          %p299 = pneg %p112
        $region46: #{tpu_custom_call.1} parent=35 // pred_check_branch
          %301 = sbr.rel (%p299) target = $region48
        $region47: #{tpu_custom_call.1} parent=35 // pred_region
          %303 = dma.done %s295, 2048
        $region48: #{tpu_custom_call.1} parent=35 // pred_fallthru
          _
        %s304 = sand.u32 %s125, 1
        %s305 = scalar_lea.sflag [#allocation10], %s304
        %s306 = sand.u32 %s125, 1
        %s307 = smul.addr %s306, 128
        %s308 = scalar_lea.vmem [#allocation9], %s307
        // Predicated region
        $region49: #{tpu_custom_call.1} parent=35 // pred_check
          %p309 = pneg %p138
        $region50: #{tpu_custom_call.1} parent=35 // pred_check_branch
          %311 = sbr.rel (%p309) target = $region52
        $region51: #{tpu_custom_call.1} parent=35 // pred_region
          %313 = dma.done %s305, 2048
        $region52: #{tpu_custom_call.1} parent=35 // pred_fallthru
          _
        %s314 = sand.u32 %s47, 1
        %s315 = scalar_lea.sflag [#allocation4], %s314
        %s316 = sand.u32 %s47, 1
        %s317 = smul.addr %s316, 8
        %s318 = scalar_lea.vmem [#allocation3], %s317
        %p319 = pneg %p60
        %p320 = pneg %p57
        %s321 = sand.u32 %s27, 1
        %s322 = scalar_lea.sflag [#allocation7], %s321
        %s323 = sand.u32 %s73, 1
        %s324 = smul.addr %s323, 128
        %s325 = scalar_lea.vmem [#allocation6], %s324
        %p326 = pneg %p86
        %p327 = pneg %p83
        %s328 = sand.u32 %s27, 1
        %s329 = scalar_lea.sflag [#allocation7], %s328
        %s330 = sand.u32 %s99, 1
        %s331 = smul.addr %s330, 128
        %s332 = scalar_lea.vmem [#allocation8], %s331
        %p333 = pneg %p112
        %p334 = pneg %p109
        %s335 = sand.u32 %s125, 1
        %s336 = scalar_lea.sflag [#allocation10], %s335
        %s337 = sand.u32 %s125, 1
        %s338 = smul.addr %s337, 128
        %s339 = scalar_lea.vmem [#allocation9], %s338
        %p340 = pneg %p138
        %p341 = pneg %p135
        %p342 = pneg %p166
        %p343 = pneg %p163
        %s344 = sand.u32 %s153, 1
        %s345 = scalar_lea.sflag [#allocation5], %s344
        %s346 = sand.u32 %s153, 1
        %s347 = smul.addr %s346, 8
        %s348 = scalar_lea.vmem [#allocation11], %s347
        %p349 = scmp.eq.s32.totalorder %s32, 0
        // Predicated region
        $region53: #{tpu_custom_call.1} parent=35 // pred_check
          %p350 = pneg %p349
        $region54: #{tpu_custom_call.1} parent=35 // pred_check_branch
          %352 = sbr.rel (%p350) target = $region56
        $region55: #{tpu_custom_call.1} parent=35 // pred_region
          %v353 = vld [vmem:[%s298] sm:$0xff]
          %v354 = vld [vmem:[%s298 + $0x8] sm:$0xff]
          %v355 = vld [vmem:[%s298 + $0x10] sm:$0xff]
          %v356 = vld [vmem:[%s298 + $0x18] sm:$0xff]
          %v357 = vld [vmem:[%s298 + $0x20] sm:$0xff]
          %v358 = vld [vmem:[%s298 + $0x28] sm:$0xff]
          %v359 = vld [vmem:[%s298 + $0x30] sm:$0xff]
          %v360 = vld [vmem:[%s298 + $0x38] sm:$0xff]
          %v361 = vld [vmem:[%s298 + $0x40] sm:$0xff]
          %v362 = vld [vmem:[%s298 + $0x48] sm:$0xff]
          %v363 = vld [vmem:[%s298 + $0x50] sm:$0xff]
          %v364 = vld [vmem:[%s298 + $0x58] sm:$0xff]
          %v365 = vld [vmem:[%s298 + $0x60] sm:$0xff]
          %v366 = vld [vmem:[%s298 + $0x68] sm:$0xff]
          %v367 = vld [vmem:[%s298 + $0x70] sm:$0xff]
          %v368 = vld [vmem:[%s298 + $0x78] sm:$0xff]
          %vm369 = vcmp.gt.f32.partialorder %v353, 20.0
          %vm370 = vcmp.gt.f32.partialorder %v354, 20.0
          %vm371 = vcmp.gt.f32.partialorder %v355, 20.0
          %vm372 = vcmp.gt.f32.partialorder %v356, 20.0
          %vm373 = vcmp.gt.f32.partialorder %v357, 20.0
          %vm374 = vcmp.gt.f32.partialorder %v358, 20.0
          %vm375 = vcmp.gt.f32.partialorder %v359, 20.0
          %vm376 = vcmp.gt.f32.partialorder %v360, 20.0
          %vm377 = vcmp.gt.f32.partialorder %v361, 20.0
          %vm378 = vcmp.gt.f32.partialorder %v362, 20.0
          %vm379 = vcmp.gt.f32.partialorder %v363, 20.0
          %vm380 = vcmp.gt.f32.partialorder %v364, 20.0
          %vm381 = vcmp.gt.f32.partialorder %v365, 20.0
          %vm382 = vcmp.gt.f32.partialorder %v366, 20.0
          %vm383 = vcmp.gt.f32.partialorder %v367, 20.0
          %vm384 = vcmp.gt.f32.partialorder %v368, 20.0
          %v385 = vmin.f32 %v353, 20.0
          %v386 = vmin.f32 %v354, 20.0
          %v387 = vmin.f32 %v355, 20.0
          %v388 = vmin.f32 %v356, 20.0
          %v389 = vmin.f32 %v357, 20.0
          %v390 = vmin.f32 %v358, 20.0
          %v391 = vmin.f32 %v359, 20.0
          %v392 = vmin.f32 %v360, 20.0
          %v393 = vmin.f32 %v361, 20.0
          %v394 = vmin.f32 %v362, 20.0
          %v395 = vmin.f32 %v363, 20.0
          %v396 = vmin.f32 %v364, 20.0
          %v397 = vmin.f32 %v365, 20.0
          %v398 = vmin.f32 %v366, 20.0
          %v399 = vmin.f32 %v367, 20.0
          %v400 = vmin.f32 %v368, 20.0
          %v401 = vmul.f32 %v385, 1.442695
          %v402 = vpow.pop %v401
          %v403 = vmul.f32 %v386, 1.442695
          %v404 = vpow.pop %v403
          %v405 = vmul.f32 %v387, 1.442695
          %v406 = vpow.pop %v405
          %v407 = vmul.f32 %v388, 1.442695
          %v408 = vpow.pop %v407
          %v409 = vmul.f32 %v389, 1.442695
          %v410 = vpow.pop %v409
          %v411 = vmul.f32 %v390, 1.442695
          %v412 = vpow.pop %v411
          %v413 = vmul.f32 %v391, 1.442695
          %v414 = vpow.pop %v413
          %v415 = vmul.f32 %v392, 1.442695
          %v416 = vpow.pop %v415
          %v417 = vmul.f32 %v393, 1.442695
          %v418 = vpow.pop %v417
          %v419 = vmul.f32 %v394, 1.442695
          %v420 = vpow.pop %v419
          %v421 = vmul.f32 %v395, 1.442695
          %v422 = vpow.pop %v421
          %v423 = vmul.f32 %v396, 1.442695
          %v424 = vpow.pop %v423
          %v425 = vmul.f32 %v397, 1.442695
          %v426 = vpow.pop %v425
          %v427 = vmul.f32 %v398, 1.442695
          %v428 = vpow.pop %v427
          %v429 = vmul.f32 %v399, 1.442695
          %v430 = vpow.pop %v429
          %v431 = vmul.f32 %v400, 1.442695
          %v432 = vpow.pop %v431
          %v433 = vadd.f32 %v402, 1.0
          %v434 = vlog2.pop %v433
          %v435 = vmul.f32 %v434, 0.6931472
          %v436 = vmul.f32 -0.5, %v402
          %v437 = vadd.f32 %v436, 1.0
          %v438 = vmul.f32 %v437, %v402
          %v439 = vand.u32 2147483647, %v402
          %vm440 = vcmp.lt.f32.partialorder %v439, 0.0004427343
          %v441 = vsel %vm440, %v438, %v435
          %v442 = vadd.f32 %v404, 1.0
          %v443 = vlog2.pop %v442
          %v444 = vmul.f32 %v443, 0.6931472
          %v445 = vmul.f32 -0.5, %v404
          %v446 = vadd.f32 %v445, 1.0
          %v447 = vmul.f32 %v446, %v404
          %v448 = vand.u32 2147483647, %v404
          %vm449 = vcmp.lt.f32.partialorder %v448, 0.0004427343
          %v450 = vsel %vm449, %v447, %v444
          %v451 = vadd.f32 %v406, 1.0
          %v452 = vlog2.pop %v451
          %v453 = vmul.f32 %v452, 0.6931472
          %v454 = vmul.f32 -0.5, %v406
          %v455 = vadd.f32 %v454, 1.0
          %v456 = vmul.f32 %v455, %v406
          %v457 = vand.u32 2147483647, %v406
          %vm458 = vcmp.lt.f32.partialorder %v457, 0.0004427343
          %v459 = vsel %vm458, %v456, %v453
          %v460 = vadd.f32 %v408, 1.0
          %v461 = vlog2.pop %v460
          %v462 = vmul.f32 %v461, 0.6931472
          %v463 = vmul.f32 -0.5, %v408
          %v464 = vadd.f32 %v463, 1.0
          %v465 = vmul.f32 %v464, %v408
          %v466 = vand.u32 2147483647, %v408
          %vm467 = vcmp.lt.f32.partialorder %v466, 0.0004427343
          %v468 = vsel %vm467, %v465, %v462
          %v469 = vadd.f32 %v410, 1.0
          %v470 = vlog2.pop %v469
          %v471 = vmul.f32 %v470, 0.6931472
          %v472 = vmul.f32 -0.5, %v410
          %v473 = vadd.f32 %v472, 1.0
          %v474 = vmul.f32 %v473, %v410
          %v475 = vand.u32 2147483647, %v410
          %vm476 = vcmp.lt.f32.partialorder %v475, 0.0004427343
          %v477 = vsel %vm476, %v474, %v471
          %v478 = vadd.f32 %v412, 1.0
          %v479 = vlog2.pop %v478
          %v480 = vmul.f32 %v479, 0.6931472
          %v481 = vmul.f32 -0.5, %v412
          %v482 = vadd.f32 %v481, 1.0
          %v483 = vmul.f32 %v482, %v412
          %v484 = vand.u32 2147483647, %v412
          %vm485 = vcmp.lt.f32.partialorder %v484, 0.0004427343
          %v486 = vsel %vm485, %v483, %v480
          %v487 = vadd.f32 %v414, 1.0
          %v488 = vlog2.pop %v487
          %v489 = vmul.f32 %v488, 0.6931472
          %v490 = vmul.f32 -0.5, %v414
          %v491 = vadd.f32 %v490, 1.0
          %v492 = vmul.f32 %v491, %v414
          %v493 = vand.u32 2147483647, %v414
          %vm494 = vcmp.lt.f32.partialorder %v493, 0.0004427343
          %v495 = vsel %vm494, %v492, %v489
          %v496 = vadd.f32 %v416, 1.0
          %v497 = vlog2.pop %v496
          %v498 = vmul.f32 %v497, 0.6931472
          %v499 = vmul.f32 -0.5, %v416
          %v500 = vadd.f32 %v499, 1.0
          %v501 = vmul.f32 %v500, %v416
          %v502 = vand.u32 2147483647, %v416
          %vm503 = vcmp.lt.f32.partialorder %v502, 0.0004427343
          %v504 = vsel %vm503, %v501, %v498
          %v505 = vadd.f32 %v418, 1.0
          %v506 = vlog2.pop %v505
          %v507 = vmul.f32 %v506, 0.6931472
          %v508 = vmul.f32 -0.5, %v418
          %v509 = vadd.f32 %v508, 1.0
          %v510 = vmul.f32 %v509, %v418
          %v511 = vand.u32 2147483647, %v418
          %vm512 = vcmp.lt.f32.partialorder %v511, 0.0004427343
          %v513 = vsel %vm512, %v510, %v507
          %v514 = vadd.f32 %v420, 1.0
          %v515 = vlog2.pop %v514
          %v516 = vmul.f32 %v515, 0.6931472
          %v517 = vmul.f32 -0.5, %v420
          %v518 = vadd.f32 %v517, 1.0
          %v519 = vmul.f32 %v518, %v420
          %v520 = vand.u32 2147483647, %v420
          %vm521 = vcmp.lt.f32.partialorder %v520, 0.0004427343
          %v522 = vsel %vm521, %v519, %v516
          %v523 = vadd.f32 %v422, 1.0
          %v524 = vlog2.pop %v523
          %v525 = vmul.f32 %v524, 0.6931472
          %v526 = vmul.f32 -0.5, %v422
          %v527 = vadd.f32 %v526, 1.0
          %v528 = vmul.f32 %v527, %v422
          %v529 = vand.u32 2147483647, %v422
          %vm530 = vcmp.lt.f32.partialorder %v529, 0.0004427343
          %v531 = vsel %vm530, %v528, %v525
          %v532 = vadd.f32 %v424, 1.0
          %v533 = vlog2.pop %v532
          %v534 = vmul.f32 %v533, 0.6931472
          %v535 = vmul.f32 -0.5, %v424
          %v536 = vadd.f32 %v535, 1.0
          %v537 = vmul.f32 %v536, %v424
          %v538 = vand.u32 2147483647, %v424
          %vm539 = vcmp.lt.f32.partialorder %v538, 0.0004427343
          %v540 = vsel %vm539, %v537, %v534
          %v541 = vadd.f32 %v426, 1.0
          %v542 = vlog2.pop %v541
          %v543 = vmul.f32 %v542, 0.6931472
          %v544 = vmul.f32 -0.5, %v426
          %v545 = vadd.f32 %v544, 1.0
          %v546 = vmul.f32 %v545, %v426
          %v547 = vand.u32 2147483647, %v426
          %vm548 = vcmp.lt.f32.partialorder %v547, 0.0004427343
          %v549 = vsel %vm548, %v546, %v543
          %v550 = vadd.f32 %v428, 1.0
          %v551 = vlog2.pop %v550
          %v552 = vmul.f32 %v551, 0.6931472
          %v553 = vmul.f32 -0.5, %v428
          %v554 = vadd.f32 %v553, 1.0
          %v555 = vmul.f32 %v554, %v428
          %v556 = vand.u32 2147483647, %v428
          %vm557 = vcmp.lt.f32.partialorder %v556, 0.0004427343
          %v558 = vsel %vm557, %v555, %v552
          %v559 = vadd.f32 %v430, 1.0
          %v560 = vlog2.pop %v559
          %v561 = vmul.f32 %v560, 0.6931472
          %v562 = vmul.f32 -0.5, %v430
          %v563 = vadd.f32 %v562, 1.0
          %v564 = vmul.f32 %v563, %v430
          %v565 = vand.u32 2147483647, %v430
          %vm566 = vcmp.lt.f32.partialorder %v565, 0.0004427343
          %v567 = vsel %vm566, %v564, %v561
          %v568 = vadd.f32 %v432, 1.0
          %v569 = vlog2.pop %v568
          %v570 = vmul.f32 %v569, 0.6931472
          %v571 = vmul.f32 -0.5, %v432
          %v572 = vadd.f32 %v571, 1.0
          %v573 = vmul.f32 %v572, %v432
          %v574 = vand.u32 2147483647, %v432
          %vm575 = vcmp.lt.f32.partialorder %v574, 0.0004427343
          %v576 = vsel %vm575, %v573, %v570
          %v577 = vsel %vm369, %v353, %v441
          %v578 = vsel %vm370, %v354, %v450
          %v579 = vsel %vm371, %v355, %v459
          %v580 = vsel %vm372, %v356, %v468
          %v581 = vsel %vm373, %v357, %v477
          %v582 = vsel %vm374, %v358, %v486
          %v583 = vsel %vm375, %v359, %v495
          %v584 = vsel %vm376, %v360, %v504
          %v585 = vsel %vm377, %v361, %v513
          %v586 = vsel %vm378, %v362, %v522
          %v587 = vsel %vm379, %v363, %v531
          %v588 = vsel %vm380, %v364, %v540
          %v589 = vsel %vm381, %v365, %v549
          %v590 = vsel %vm382, %v366, %v558
          %v591 = vsel %vm383, %v367, %v567
          %v592 = vsel %vm384, %v368, %v576
          %v593 = vld [vmem:[%s288] sm:$0xff]
          %v594 = vld [vmem:[%s288 + $0x8] sm:$0xff]
          %v595 = vld [vmem:[%s288 + $0x10] sm:$0xff]
          %v596 = vld [vmem:[%s288 + $0x18] sm:$0xff]
          %v597 = vld [vmem:[%s288 + $0x20] sm:$0xff]
          %v598 = vld [vmem:[%s288 + $0x28] sm:$0xff]
          %v599 = vld [vmem:[%s288 + $0x30] sm:$0xff]
          %v600 = vld [vmem:[%s288 + $0x38] sm:$0xff]
          %v601 = vld [vmem:[%s288 + $0x40] sm:$0xff]
          %v602 = vld [vmem:[%s288 + $0x48] sm:$0xff]
          %v603 = vld [vmem:[%s288 + $0x50] sm:$0xff]
          %v604 = vld [vmem:[%s288 + $0x58] sm:$0xff]
          %v605 = vld [vmem:[%s288 + $0x60] sm:$0xff]
          %v606 = vld [vmem:[%s288 + $0x68] sm:$0xff]
          %v607 = vld [vmem:[%s288 + $0x70] sm:$0xff]
          %v608 = vld [vmem:[%s288 + $0x78] sm:$0xff]
          %v609 = vld [vmem:[%s308] sm:$0xff]
          %v610 = vld [vmem:[%s308 + $0x8] sm:$0xff]
          %v611 = vld [vmem:[%s308 + $0x10] sm:$0xff]
          %v612 = vld [vmem:[%s308 + $0x18] sm:$0xff]
          %v613 = vld [vmem:[%s308 + $0x20] sm:$0xff]
          %v614 = vld [vmem:[%s308 + $0x28] sm:$0xff]
          %v615 = vld [vmem:[%s308 + $0x30] sm:$0xff]
          %v616 = vld [vmem:[%s308 + $0x38] sm:$0xff]
          %v617 = vld [vmem:[%s308 + $0x40] sm:$0xff]
          %v618 = vld [vmem:[%s308 + $0x48] sm:$0xff]
          %v619 = vld [vmem:[%s308 + $0x50] sm:$0xff]
          %v620 = vld [vmem:[%s308 + $0x58] sm:$0xff]
          %v621 = vld [vmem:[%s308 + $0x60] sm:$0xff]
          %v622 = vld [vmem:[%s308 + $0x68] sm:$0xff]
          %v623 = vld [vmem:[%s308 + $0x70] sm:$0xff]
          %v624 = vld [vmem:[%s308 + $0x78] sm:$0xff]
          %v625 = vmul.f32 %v577, %v609
          %v626 = vmul.f32 %v578, %v610
          %v627 = vmul.f32 %v579, %v611
          %v628 = vmul.f32 %v580, %v612
          %v629 = vmul.f32 %v581, %v613
          %v630 = vmul.f32 %v582, %v614
          %v631 = vmul.f32 %v583, %v615
          %v632 = vmul.f32 %v584, %v616
          %v633 = vmul.f32 %v585, %v617
          %v634 = vmul.f32 %v586, %v618
          %v635 = vmul.f32 %v587, %v619
          %v636 = vmul.f32 %v588, %v620
          %v637 = vmul.f32 %v589, %v621
          %v638 = vmul.f32 %v590, %v622
          %v639 = vmul.f32 %v591, %v623
          %v640 = vmul.f32 %v592, %v624
          %v641 = vadd.f32 %v593, %v625
          %v642 = vadd.f32 %v594, %v626
          %v643 = vadd.f32 %v595, %v627
          %v644 = vadd.f32 %v596, %v628
          %v645 = vadd.f32 %v597, %v629
          %v646 = vadd.f32 %v598, %v630
          %v647 = vadd.f32 %v599, %v631
          %v648 = vadd.f32 %v600, %v632
          %v649 = vadd.f32 %v601, %v633
          %v650 = vadd.f32 %v602, %v634
          %v651 = vadd.f32 %v603, %v635
          %v652 = vadd.f32 %v604, %v636
          %v653 = vadd.f32 %v605, %v637
          %v654 = vadd.f32 %v606, %v638
          %v655 = vadd.f32 %v607, %v639
          %v656 = vadd.f32 %v608, %v640
          %657 = vst [vmem:[#allocation2] sm:$0xff] %v641
          %658 = vst [vmem:[#allocation2 + $0x8] sm:$0xff] %v642
          %659 = vst [vmem:[#allocation2 + $0x10] sm:$0xff] %v643
          %660 = vst [vmem:[#allocation2 + $0x18] sm:$0xff] %v644
          %661 = vst [vmem:[#allocation2 + $0x20] sm:$0xff] %v645
          %662 = vst [vmem:[#allocation2 + $0x28] sm:$0xff] %v646
          %663 = vst [vmem:[#allocation2 + $0x30] sm:$0xff] %v647
          %664 = vst [vmem:[#allocation2 + $0x38] sm:$0xff] %v648
          %665 = vst [vmem:[#allocation2 + $0x40] sm:$0xff] %v649
          %666 = vst [vmem:[#allocation2 + $0x48] sm:$0xff] %v650
          %667 = vst [vmem:[#allocation2 + $0x50] sm:$0xff] %v651
          %668 = vst [vmem:[#allocation2 + $0x58] sm:$0xff] %v652
          %669 = vst [vmem:[#allocation2 + $0x60] sm:$0xff] %v653
          %670 = vst [vmem:[#allocation2 + $0x68] sm:$0xff] %v654
          %671 = vst [vmem:[#allocation2 + $0x70] sm:$0xff] %v655
          %672 = vst [vmem:[#allocation2 + $0x78] sm:$0xff] %v656
        $region56: #{tpu_custom_call.1} parent=35 // pred_fallthru
          _
        %v673 = vld [vmem:[%s278] sm:$0xff]
        %v674 = vld [vmem:[#allocation2] sm:$0xff]
        %v675 = vld [vmem:[#allocation2 + $0x8] sm:$0xff]
        %v676 = vld [vmem:[#allocation2 + $0x10] sm:$0xff]
        %v677 = vld [vmem:[#allocation2 + $0x18] sm:$0xff]
        %v678 = vld [vmem:[#allocation2 + $0x20] sm:$0xff]
        %v679 = vld [vmem:[#allocation2 + $0x28] sm:$0xff]
        %v680 = vld [vmem:[#allocation2 + $0x30] sm:$0xff]
        %v681 = vld [vmem:[#allocation2 + $0x38] sm:$0xff]
        %v682 = vld [vmem:[#allocation2 + $0x40] sm:$0xff]
        %v683 = vld [vmem:[#allocation2 + $0x48] sm:$0xff]
        %v684 = vld [vmem:[#allocation2 + $0x50] sm:$0xff]
        %v685 = vld [vmem:[#allocation2 + $0x58] sm:$0xff]
        %v686 = vld [vmem:[#allocation2 + $0x60] sm:$0xff]
        %v687 = vld [vmem:[#allocation2 + $0x68] sm:$0xff]
        %v688 = vld [vmem:[#allocation2 + $0x70] sm:$0xff]
        %v689 = vld [vmem:[#allocation2 + $0x78] sm:$0xff]
        %690 = vmatpush.msra.mxu0 %v689
        %691 = vmatpush.msra.mxu0 %v688
        %692 = vmatpush.msra.mxu0 %v687
        %693 = vmatpush.msra.mxu0 %v686
        %694 = vmatpush.msra.mxu0 %v685
        %695 = vmatpush.msra.mxu0 %v684
        %696 = vmatpush.msra.mxu0 %v683
        %697 = vmatpush.msra.mxu0 %v682
        %698 = vmatpush.msra.mxu0 %v681
        %699 = vmatpush.msra.mxu0 %v680
        %700 = vmatpush.msra.mxu0 %v679
        %701 = vmatpush.msra.mxu0 %v678
        %702 = vmatpush.msra.mxu0 %v677
        %703 = vmatpush.msra.mxu0 %v676
        %704 = vmatpush.msra.mxu0 %v675
        %705 = vmatpush.msra.mxu0 %v674
        %706 = vmatmul.f32.gmra.mxu0 %v673
        %v707 = vpop.f32.mrf.mxu0
        %v708 = vadd.f32 0.0, %v707
        %709 = vdwg.mxu0
        %710 = vst [vmem:[%s348] sm:$0xff] %v708
        %s711 = sand.u32 %s153, 1
        %s712 = scalar_lea.sflag [#allocation5], %s711
        %s713 = sand.u32 %s153, 1
        %s714 = smul.addr %s713, 8
        %s715 = scalar_lea.vmem [#allocation11], %s714
        // Predicated region
        $region57: #{tpu_custom_call.1} parent=35 // pred_check
          %p716 = pneg %p163
        $region58: #{tpu_custom_call.1} parent=35 // pred_check_branch
          %718 = sbr.rel (%p716) target = $region60
        $region59: #{tpu_custom_call.1} parent=35 // pred_region
          %720 = vsyncadd %s712, 0
          %s721 = smul.addr %s32, 2
          %s722 = sadd.s32 %s31, %s721
          %s723 = smul.addr %s722, 8
          %s724 = scalar_lea.hbm %s4, %s723
          %s726 = sshll.u32 %s715, 4
          %s727 = int_to_ptr.vmem [resolvable:$true] %s726
          %s728 = sshll.u32 %s724, 4
          %s729 = int_to_ptr.hbm [resolvable:$true] %s728
          %731 = dma.vmem_to_hbm [thread:$0]  %s727, 128, %s729, %s712
        $region60: #{tpu_custom_call.1} parent=35 // pred_fallthru
          _
      $region36: #{tpu_custom_call.1} parent=5 // pred_fallthru
        _
      %p732 = scmp.le.s32.totalorder 2, %s22
      // Predicated region
      $region61: #{tpu_custom_call.1} parent=5 // pred_check
        %p733 = pneg %p732
      $region62: #{tpu_custom_call.1} parent=5 // pred_check_branch
        %735 = sbr.rel (%p733) target = $region64
      $region63: #{tpu_custom_call.1} parent=5 // pred_region
        %s736 = ssub.s32 %s22, 2
        // Predicated region
        $region65: #{tpu_custom_call.1} parent=63 // pred_check
          %p737 = pneg %p169
        $region66: #{tpu_custom_call.1} parent=63 // pred_check_branch
          %739 = sbr.rel (%p737) target = $region68
        $region67: #{tpu_custom_call.1} parent=63 // pred_region
          %s740 = sand.u32 %s154, 1
          %s741 = scalar_lea.sflag [#allocation5], %s740
          %s742 = sand.u32 %s154, 1
          %s743 = smul.addr %s742, 8
          %s744 = scalar_lea.vmem [#allocation11], %s743
          %746 = dma.done %s741, 128
        $region68: #{tpu_custom_call.1} parent=63 // pred_fallthru
          _
      $region64: #{tpu_custom_call.1} parent=5 // pred_fallthru
        _
    $region6: #{tpu_custom_call.1} parent=1 // loop_footer
      %s26 = sadd.s32 1, %s22
    $region7: #{tpu_custom_call.1} parent=1 // loop_footer_branch
      %21 = sbr.rel target = $region3
    $region8: #{tpu_custom_call.1} parent=1 // loop_exit
      _
    %747 = vsyncpa [#allocation4], 1
    %s748 = scalar_lea.sflag [#allocation4], 1
    %749 = vsyncpa %s748, 1
    %750 = vsyncpa [#allocation7], 1
    %s751 = scalar_lea.sflag [#allocation7], 1
    %752 = vsyncpa %s751, 1
    %753 = vsyncpa [#allocation10], 1
    %s754 = scalar_lea.sflag [#allocation10], 1
    %755 = vsyncpa %s754, 1
    %756 = vsyncpa [#allocation5], 1
    %s757 = scalar_lea.sflag [#allocation5], 1
    %758 = vsyncpa %s757, 1

</llo_original>
